<compile_context>
chip_gen: v7x
topology: tpu7x:2x2x1
jax: 0.10.0
libtpu: 0.0.40
codegen_flags: <defaults>
</compile_context>

<pallas_src>
import math

import numpy as np
import jax
import jax.numpy as jnp
from jax.experimental import pallas as pl
from jax.experimental.pallas import tpu as pltpu


def giniiconv_kernel(xfull_ref, xrows_ref, nbr_ref, x0_ref,
                     w1_ref, w1s_ref, w2_ref, b_ref, o_ref):
    """One (batch, row-tile) grid step.

    xfull_ref: [1, N, C]   all node features for this batch element (RHS of A @ X)
    xrows_ref: [1, TM, C]  rows of x in this tile (center/self term)
    nbr_ref:   [1, TM, K]  neighbor indices; self-loops already rewritten to -1
    x0_ref:    [1, TM, C]  rows of the initial-residual features x_0
    w1_ref:    [C, C]      beta*W1^T + (1-alpha)(1-beta)*I
    w1s_ref:   [C, C]      (1+eps) * (beta*W1^T + (1-alpha)(1-beta)*I)
    w2_ref:    [C, C]      beta*W2^T + alpha(1-beta)*I
    b_ref:     [1, C]      bias
    o_ref:     [1, TM, C]
    """
    x = xfull_ref[0]                     # [N, C]
    xr = xrows_ref[0]                    # [TM, C]
    nbr = nbr_ref[0]                     # [TM, K] int32
    n = x.shape[0]
    tm, k = nbr.shape

    # Adjacency-count slab A[r, j] = #{k : nbr[r, k] == j}.  Self-loop entries
    # were rewritten to -1 in the wrapper, so they never match a column id.
    col = jax.lax.broadcasted_iota(jnp.int32, (tm, n), 1)        # [TM, N]
    adj = jnp.zeros((tm, n), jnp.float32)
    for kk in range(k):                                          # K is small & static
        adj = adj + (nbr[:, kk:kk + 1] == col).astype(jnp.float32)

    # sum_{j in N(r)} x_j  ==  A @ X  (MXU)
    aggr = jnp.dot(adj, x, preferred_element_type=jnp.float32)   # [TM, C]

    # GCNII combine: all scalar mixing + the (1+eps) self term folded into the
    # pre-transformed weight matrices (computed once in the wrapper).
    y = jnp.dot(aggr, w1_ref[...], preferred_element_type=jnp.float32)
    y = y + jnp.dot(xr, w1s_ref[...], preferred_element_type=jnp.float32)
    y = y + jnp.dot(x0_ref[0], w2_ref[...], preferred_element_type=jnp.float32)
    y = y + b_ref[...]
    o_ref[0] = jnp.maximum(y, 0.0).astype(o_ref.dtype)


def _pick_row_tile(n, target=256):
    """Largest multiple of 8 that divides n and is <= target (else n itself)."""
    if n <= target:
        return n
    for tm in range(target, 0, -8):
        if tm % 8 == 0 and n % tm == 0:
            return tm
    return n


def giniiconv(x_nchw, x0_bnc, edge_index, weight1, weight2, bias,
              eps, alpha, beta, *, row_tile_target=256):
    """x_nchw: [B, C, N, 1] f32; x0_bnc: [B, N, C] f32; edge_index: [2, B, N, K] int;
    weight1/weight2: [C, C] (nn.Linear weights, bias=False); bias: broadcastable
    to [C]; eps/alpha/beta: python floats.  Returns [B, C, N, 1] f32."""
    B, C, N, _ = x_nchw.shape
    K = edge_index.shape[-1]
    assert weight1.shape == (C, C) and weight2.shape == (C, C), (
        "GINIIConv residual mixing requires in_channels == out_channels")

    x_bnc = jnp.transpose(x_nchw[..., 0], (0, 2, 1)).astype(jnp.float32)   # [B, N, C]
    x0_bnc = x0_bnc.astype(jnp.float32)

    # TODO(synk): exact `remove_self_loops` semantics are repo-specific; here it
    # drops neighbor contributions where edge_index[0] == edge_index[1].
    nbr = edge_index[0].astype(jnp.int32)                                  # [B, N, K]
    ctr = edge_index[1].astype(jnp.int32)                                  # [B, N, K]
    nbr_m = jnp.where(nbr == ctr, jnp.int32(-1), nbr)                      # [B, N, K]

    # Fold GCNII scalar mixing + (1+eps) self term into three [C, C] matrices:
    #   out = (A@x) @ W1p + x @ ((1+eps)*W1p) + x0 @ W2p + bias
    c1 = (1.0 - alpha) * (1.0 - beta)
    c2 = alpha * (1.0 - beta)
    eye = jnp.eye(C, dtype=jnp.float32)
    w1p = beta * jnp.transpose(weight1).astype(jnp.float32) + c1 * eye     # [C, C]
    w2p = beta * jnp.transpose(weight2).astype(jnp.float32) + c2 * eye     # [C, C]
    w1s = (1.0 + eps) * w1p                                                # [C, C]
    b2d = jnp.reshape(bias, (1, C)).astype(jnp.float32)                    # [1, C]

    TM = _pick_row_tile(N, row_tile_target)
    grid = (B, N // TM)

    # Explicit VMEM budget: resident x + double-buffered tiles + [TM, N] slab.
    fsz = 4
    vmem_bytes = fsz * (
        2 * N * C                # x_full window (double-buffered)
        + 2 * 3 * TM * C         # x_rows / x_0 / out windows
        + 2 * TM * 128           # neighbor-index window (lane-padded)
        + 2 * 3 * C * C + 2 * C  # folded weights + bias
        + 2 * TM * N             # adjacency slab + compare temporaries
        + 4 * TM * C)            # matmul results / misc
    vmem_limit = int(min(max(2 * vmem_bytes, 32 * 1024 * 1024),
                         64 * 1024 * 1024))   # stay under v7x's 64 MiB VMEM

    out_bnc = pl.pallas_call(
        giniiconv_kernel,
        out_shape=jax.ShapeDtypeStruct((B, N, C), jnp.float32),
        grid=grid,
        in_specs=[
            pl.BlockSpec((1, N, C), lambda b, i: (b, 0, 0)),    # x (all rows, RHS of A@X)
            pl.BlockSpec((1, TM, C), lambda b, i: (b, i, 0)),   # x rows of this tile
            pl.BlockSpec((1, TM, K), lambda b, i: (b, i, 0)),   # masked neighbor indices
            pl.BlockSpec((1, TM, C), lambda b, i: (b, i, 0)),   # x_0 rows
            pl.BlockSpec((C, C), lambda b, i: (0, 0)),          # w1p
            pl.BlockSpec((C, C), lambda b, i: (0, 0)),          # w1s
            pl.BlockSpec((C, C), lambda b, i: (0, 0)),          # w2p
            pl.BlockSpec((1, C), lambda b, i: (0, 0)),          # bias
        ],
        out_specs=pl.BlockSpec((1, TM, C), lambda b, i: (b, i, 0)),
        compiler_params=pltpu.CompilerParams(
            dimension_semantics=("parallel", "parallel"),
            vmem_limit_bytes=vmem_limit),
    )(x_bnc, x_bnc, nbr_m, x0_bnc, w1p, w1s, w2p, b2d)

    # back to NCHW: [B, C, N, 1]
    return jnp.transpose(out_bnc, (0, 2, 1))[..., None]


def giniiconv_reference(x_nchw, x0_bnc, edge_index, weight1, weight2, bias,
                        eps, alpha, beta):
    """Pure-JAX reference mirroring the PyTorch forward (norm=None path)."""
    hp = jax.lax.Precision.HIGHEST
    nbr = edge_index[0]                         # [B, N, K]
    ctr = edge_index[1]                         # [B, N, K]
    x_sq = x_nchw[..., 0]                       # [B, C, N]
    # batched_index_select: x_j[b, c, i, k] = x[b, c, nbr[b, i, k]]
    x_j = jax.vmap(lambda xb, ib: xb[:, ib])(x_sq, nbr)           # [B, C, N, K]
    mask = (nbr != ctr).astype(x_nchw.dtype)[:, None]             # remove self loops
    aggr = (1.0 + eps) * x_nchw + jnp.sum(x_j * mask, axis=-1, keepdims=True)
    aggr = jnp.transpose(aggr[..., 0], (0, 2, 1))                 # [B, N, C]
    c1 = (1.0 - alpha) * (1.0 - beta)
    c2 = alpha * (1.0 - beta)
    out = aggr * c1 + jnp.matmul(aggr, weight1.T, precision=hp) * beta
    out = out + x0_bnc * c2 + jnp.matmul(x0_bnc, weight2.T, precision=hp) * beta
    out = out + jnp.reshape(bias, (1, 1, -1))
    out = jnp.maximum(out, 0.0)
    return jnp.transpose(out, (0, 2, 1))[..., None]               # [B, C, N, 1]


if __name__ == "__main__":
    B, C, N, K = 2, 32, 16, 4
    eps = 0.0                              # GINIIConv default (train_eps=False)
    alpha = 0.1
    theta, layer = 0.5, 2
    beta = math.log(theta / layer + 1.0)   # beta = log(theta/layer + 1)

    key = jax.random.PRNGKey(0)
    kx, k0, kw1, kw2, kb, kn = jax.random.split(key, 6)

    x = jax.random.normal(kx, (B, C, N, 1), dtype=jnp.float32)    # [B, C, N, 1]
    x0 = jax.random.normal(k0, (B, N, C), dtype=jnp.float32)      # [B, N, C]

    bound = 1.0 / np.sqrt(C)
    w1 = jax.random.uniform(kw1, (C, C), jnp.float32, -bound, bound)   # Linear [out, in]
    w2 = jax.random.uniform(kw2, (C, C), jnp.float32, -bound, bound)
    bias = jax.random.uniform(kb, (1, 1, C), jnp.float32, -bound, bound)

    # edge_index [2, B, N, K]: [0] = neighbor idx, [1] = center idx
    nbr_idx = jax.random.randint(kn, (B, N, K), 0, N, dtype=jnp.int32)
    ctr_idx = jnp.broadcast_to(jnp.arange(N, dtype=jnp.int32)[None, :, None], (B, N, K))
    edge_index = jnp.stack([nbr_idx, ctr_idx], axis=0)

    out = giniiconv(x, x0, edge_index, w1, w2, bias, eps, alpha, beta)
    out = jax.block_until_ready(out)

    ref = giniiconv_reference(x, x0, edge_index, w1, w2, bias, eps, alpha, beta)
    np.testing.assert_allclose(np.asarray(out), np.asarray(ref), rtol=1e-4, atol=1e-4)

    print("KERNEL_OK")
</pallas_src>

<mosaic_0001>
module attributes {stable_mosaic.version = 11 : i64} {
  func.func @giniiconv_kernel(%arg0: i32, %arg1: i32, %arg2: memref<1x16x32xf32, #tpu.memory_space<vmem>>, %arg3: memref<1x16x32xf32, #tpu.memory_space<vmem>>, %arg4: memref<1x16x4xi32, #tpu.memory_space<vmem>>, %arg5: memref<1x16x32xf32, #tpu.memory_space<vmem>>, %arg6: memref<32x32xf32, #tpu.memory_space<vmem>>, %arg7: memref<32x32xf32, #tpu.memory_space<vmem>>, %arg8: memref<32x32xf32, #tpu.memory_space<vmem>>, %arg9: memref<1x32xf32, #tpu.memory_space<vmem>>, %arg10: memref<1x16x32xf32, #tpu.memory_space<vmem>>) attributes {dimension_semantics = [#tpu.dimension_semantics<parallel>, #tpu.dimension_semantics<parallel>], iteration_bounds = array<i64: 2, 1>, scalar_prefetch = 0 : i64, scratch_operands = 0 : i64, tpu.core_type = #tpu.core_type<tc>, window_params = [{transform_indices = @transform_0, window_bounds = array<i64: 1, 16, 32>}, {transform_indices = @transform_1, window_bounds = array<i64: 1, 16, 32>}, {transform_indices = @transform_2, window_bounds = array<i64: 1, 16, 4>}, {transform_indices = @transform_3, window_bounds = array<i64: 1, 16, 32>}, {pipeline_mode = #tpu.pipeline_mode<synchronous>, transform_indices = @transform_4, window_bounds = array<i64: 32, 32>}, {pipeline_mode = #tpu.pipeline_mode<synchronous>, transform_indices = @transform_5, window_bounds = array<i64: 32, 32>}, {pipeline_mode = #tpu.pipeline_mode<synchronous>, transform_indices = @transform_6, window_bounds = array<i64: 32, 32>}, {pipeline_mode = #tpu.pipeline_mode<synchronous>, transform_indices = @transform_7, window_bounds = array<i64: 1, 32>}, {transform_indices = @transform_8, window_bounds = array<i64: 1, 16, 32>}]} {
    %c0 = arith.constant 0 : index
    %c0_0 = arith.constant 0 : index
    %c0_1 = arith.constant 0 : index
    %0 = vector.load %arg2[%c0, %c0_0, %c0_1] : memref<1x16x32xf32, #tpu.memory_space<vmem>>, vector<1x16x32xf32>
    %1 = vector.shape_cast %0 : vector<1x16x32xf32> to vector<16x32xf32>
    %c0_2 = arith.constant 0 : index
    %c0_3 = arith.constant 0 : index
    %c0_4 = arith.constant 0 : index
    %2 = vector.load %arg3[%c0_2, %c0_3, %c0_4] : memref<1x16x32xf32, #tpu.memory_space<vmem>>, vector<1x16x32xf32>
    %3 = vector.shape_cast %2 : vector<1x16x32xf32> to vector<16x32xf32>
    %c0_5 = arith.constant 0 : index
    %c0_6 = arith.constant 0 : index
    %c0_7 = arith.constant 0 : index
    %4 = vector.load %arg4[%c0_5, %c0_6, %c0_7] : memref<1x16x4xi32, #tpu.memory_space<vmem>>, vector<1x16x4xi32>
    %5 = vector.shape_cast %4 : vector<1x16x4xi32> to vector<16x4xi32>
    %6 = tpu.iota {dimensions = array<i32: 1>} : vector<16x16xi32>
    %cst = arith.constant 0.000000e+00 : f32
    %7 = vector.broadcast %cst : f32 to vector<16x16xf32>
    %8 = vector.extract_strided_slice %5 {offsets = [0, 0], sizes = [16, 1], strides = [1, 1]} : vector<16x4xi32> to vector<16x1xi32>
    %9 = vector.broadcast %8 : vector<16x1xi32> to vector<16x16xi32>
    %10 = arith.cmpi eq, %9, %6 : vector<16x16xi32>
    %11 = arith.extui %10 : vector<16x16xi1> to vector<16x16xi32>
    %12 = arith.sitofp %11 : vector<16x16xi32> to vector<16x16xf32>
    %13 = arith.addf %7, %12 : vector<16x16xf32>
    %14 = vector.extract_strided_slice %5 {offsets = [0, 1], sizes = [16, 1], strides = [1, 1]} : vector<16x4xi32> to vector<16x1xi32>
    %15 = vector.broadcast %14 : vector<16x1xi32> to vector<16x16xi32>
    %16 = arith.cmpi eq, %15, %6 : vector<16x16xi32>
    %17 = arith.extui %16 : vector<16x16xi1> to vector<16x16xi32>
    %18 = arith.sitofp %17 : vector<16x16xi32> to vector<16x16xf32>
    %19 = arith.addf %13, %18 : vector<16x16xf32>
    %20 = vector.extract_strided_slice %5 {offsets = [0, 2], sizes = [16, 1], strides = [1, 1]} : vector<16x4xi32> to vector<16x1xi32>
    %21 = vector.broadcast %20 : vector<16x1xi32> to vector<16x16xi32>
    %22 = arith.cmpi eq, %21, %6 : vector<16x16xi32>
    %23 = arith.extui %22 : vector<16x16xi1> to vector<16x16xi32>
    %24 = arith.sitofp %23 : vector<16x16xi32> to vector<16x16xf32>
    %25 = arith.addf %19, %24 : vector<16x16xf32>
    %26 = vector.extract_strided_slice %5 {offsets = [0, 3], sizes = [16, 1], strides = [1, 1]} : vector<16x4xi32> to vector<16x1xi32>
    %27 = vector.broadcast %26 : vector<16x1xi32> to vector<16x16xi32>
    %28 = arith.cmpi eq, %27, %6 : vector<16x16xi32>
    %29 = arith.extui %28 : vector<16x16xi1> to vector<16x16xi32>
    %30 = arith.sitofp %29 : vector<16x16xi32> to vector<16x16xf32>
    %31 = arith.addf %25, %30 : vector<16x16xf32>
    %cst_8 = arith.constant dense<0.000000e+00> : vector<16x32xf32>
    %32 = tpu.matmul %31, %1, %cst_8 {dimension_numbers = #tpu.dot_dimension_numbers<[1], [0], [0], [1], [0, 0, 1, 1], [], []>} : vector<16x16xf32>, vector<16x32xf32>, vector<16x32xf32> -> vector<16x32xf32>
    %c0_9 = arith.constant 0 : index
    %c0_10 = arith.constant 0 : index
    %33 = vector.load %arg6[%c0_9, %c0_10] : memref<32x32xf32, #tpu.memory_space<vmem>>, vector<32x32xf32>
    %cst_11 = arith.constant dense<0.000000e+00> : vector<16x32xf32>
    %34 = tpu.matmul %32, %33, %cst_11 {dimension_numbers = #tpu.dot_dimension_numbers<[1], [0], [0], [1], [0, 0, 1, 1], [], []>} : vector<16x32xf32>, vector<32x32xf32>, vector<16x32xf32> -> vector<16x32xf32>
    %c0_12 = arith.constant 0 : index
    %c0_13 = arith.constant 0 : index
    %35 = vector.load %arg7[%c0_12, %c0_13] : memref<32x32xf32, #tpu.memory_space<vmem>>, vector<32x32xf32>
    %cst_14 = arith.constant dense<0.000000e+00> : vector<16x32xf32>
    %36 = tpu.matmul %3, %35, %cst_14 {dimension_numbers = #tpu.dot_dimension_numbers<[1], [0], [0], [1], [0, 0, 1, 1], [], []>} : vector<16x32xf32>, vector<32x32xf32>, vector<16x32xf32> -> vector<16x32xf32>
    %37 = arith.addf %34, %36 : vector<16x32xf32>
    %c0_15 = arith.constant 0 : index
    %c0_16 = arith.constant 0 : index
    %c0_17 = arith.constant 0 : index
    %38 = vector.load %arg5[%c0_15, %c0_16, %c0_17] : memref<1x16x32xf32, #tpu.memory_space<vmem>>, vector<1x16x32xf32>
    %39 = vector.shape_cast %38 : vector<1x16x32xf32> to vector<16x32xf32>
    %c0_18 = arith.constant 0 : index
    %c0_19 = arith.constant 0 : index
    %40 = vector.load %arg8[%c0_18, %c0_19] : memref<32x32xf32, #tpu.memory_space<vmem>>, vector<32x32xf32>
    %cst_20 = arith.constant dense<0.000000e+00> : vector<16x32xf32>
    %41 = tpu.matmul %39, %40, %cst_20 {dimension_numbers = #tpu.dot_dimension_numbers<[1], [0], [0], [1], [0, 0, 1, 1], [], []>} : vector<16x32xf32>, vector<32x32xf32>, vector<16x32xf32> -> vector<16x32xf32>
    %42 = arith.addf %37, %41 : vector<16x32xf32>
    %c0_21 = arith.constant 0 : index
    %c0_22 = arith.constant 0 : index
    %43 = vector.load %arg9[%c0_21, %c0_22] : memref<1x32xf32, #tpu.memory_space<vmem>>, vector<1x32xf32>
    %44 = vector.broadcast %43 : vector<1x32xf32> to vector<16x32xf32>
    %45 = arith.addf %42, %44 : vector<16x32xf32>
    %cst_23 = arith.constant 0.000000e+00 : f32
    %46 = vector.broadcast %cst_23 : f32 to vector<16x32xf32>
    %47 = arith.maximumf %45, %46 : vector<16x32xf32>
    %c0_24 = arith.constant 0 : index
    %c0_25 = arith.constant 0 : index
    %c0_26 = arith.constant 0 : index
    %48 = vector.load %arg10[%c0_24, %c0_25, %c0_26] : memref<1x16x32xf32, #tpu.memory_space<vmem>>, vector<1x16x32xf32>
    %49 = vector.shape_cast %48 : vector<1x16x32xf32> to vector<16x32xf32>
    %50 = vector.shape_cast %47 : vector<16x32xf32> to vector<1x16x32xf32>
    tpu.vector_store %arg10[%c0_24, %c0_25, %c0_26], %50 {strides = array<i32>} : memref<1x16x32xf32, #tpu.memory_space<vmem>>, vector<1x16x32xf32>,
    return
  }
  func.func @transform_0(%arg0: i32, %arg1: i32) -> (i32, i32, i32) {
    %c0_i32 = arith.constant 0 : i32
    %c0_i32_0 = arith.constant 0 : i32
    %c0_i32_1 = arith.constant 0 : i32
    return %arg0, %c0_i32, %c0_i32_0 : i32, i32, i32
  }
  func.func @transform_1(%arg0: i32, %arg1: i32) -> (i32, i32, i32) {
    %c0_i32 = arith.constant 0 : i32
    %c0_i32_0 = arith.constant 0 : i32
    return %arg0, %arg1, %c0_i32 : i32, i32, i32
  }
  func.func @transform_2(%arg0: i32, %arg1: i32) -> (i32, i32, i32) {
    %c0_i32 = arith.constant 0 : i32
    %c0_i32_0 = arith.constant 0 : i32
    return %arg0, %arg1, %c0_i32 : i32, i32, i32
  }
  func.func @transform_3(%arg0: i32, %arg1: i32) -> (i32, i32, i32) {
    %c0_i32 = arith.constant 0 : i32
    %c0_i32_0 = arith.constant 0 : i32
    return %arg0, %arg1, %c0_i32 : i32, i32, i32
  }
  func.func @transform_4(%arg0: i32, %arg1: i32) -> (i32, i32) {
    %c0_i32 = arith.constant 0 : i32
    %c0_i32_0 = arith.constant 0 : i32
    %c0_i32_1 = arith.constant 0 : i32
    return %c0_i32, %c0_i32_0 : i32, i32
  }
  func.func @transform_5(%arg0: i32, %arg1: i32) -> (i32, i32) {
    %c0_i32 = arith.constant 0 : i32
    %c0_i32_0 = arith.constant 0 : i32
    %c0_i32_1 = arith.constant 0 : i32
    return %c0_i32, %c0_i32_0 : i32, i32
  }
  func.func @transform_6(%arg0: i32, %arg1: i32) -> (i32, i32) {
    %c0_i32 = arith.constant 0 : i32
    %c0_i32_0 = arith.constant 0 : i32
    %c0_i32_1 = arith.constant 0 : i32
    return %c0_i32, %c0_i32_0 : i32, i32
  }
  func.func @transform_7(%arg0: i32, %arg1: i32) -> (i32, i32) {
    %c0_i32 = arith.constant 0 : i32
    %c0_i32_0 = arith.constant 0 : i32
    %c0_i32_1 = arith.constant 0 : i32
    return %c0_i32, %c0_i32_0 : i32, i32
  }
  func.func @transform_8(%arg0: i32, %arg1: i32) -> (i32, i32, i32) {
    %c0_i32 = arith.constant 0 : i32
    %c0_i32_0 = arith.constant 0 : i32
    return %arg0, %arg1, %c0_i32 : i32, i32, i32
  }
}

</mosaic_0001>

<llo_original>
// kernel: tpu_custom_call.1
$region0: #{tpu_custom_call.1}
  #allocation0 [shape = 'u32[]', space=smem, size = 0x4, offset = 0x4, fixed_abs, tag = 'smem constant byte address 0x4 - core index']
  #allocation1 [shape = 'u32[144,128]{1,0:T(1,128)}', space=vmem, size = 0x12000, scoped, tag = 'internal scratch']
  %s0 = inlined_call_operand.vmem [shape: f32[2,16,32], index: 0, kind: input, shape index: {}]
  %s1 = inlined_call_operand.hbm [shape: f32[2,16,32], index: 1, kind: input, shape index: {}]
  %s2 = inlined_call_operand.vmem [shape: s32[2,16,4], index: 2, kind: input, shape index: {}]
  %s3 = inlined_call_operand.hbm [shape: f32[2,16,32], index: 3, kind: input, shape index: {}]
  %s4 = inlined_call_operand.hbm [shape: f32[32,32], index: 4, kind: input, shape index: {}]
  %s5 = inlined_call_operand.hbm [shape: f32[32,32], index: 5, kind: input, shape index: {}]
  %s6 = inlined_call_operand.hbm [shape: f32[32,32], index: 6, kind: input, shape index: {}]
  %s7 = inlined_call_operand.vmem [shape: f32[1,32], index: 7, kind: input, shape index: {}]
  %s8 = inlined_call_operand.hbm [shape: f32[2,16,32], index: 8, kind: output, shape index: {}]
  %s9 = sld [smem:[#allocation0]]
  $region85: #{tpu_custom_call.1} parent=0
    _
  %s11 = ssub.s32 1, %s9
  %s12 = scalar_select 0, %s11, %s9
  $region1: #{tpu_custom_call.1} parent=0
    #allocation2 [shape = 'u8[16384]{0}', space=vmem, size = 0x4000, scoped, tag = 'input window, operand 1']
    #allocation3 [shape = 's32[2]{0}', space=sflag, size = 0x8, scoped, tag = 'scoped memory for tpu_custom_call.1']
    #allocation4 [shape = 's32[2]{0}', space=sflag, size = 0x8, scoped, tag = 'scoped memory for tpu_custom_call.1']
    #allocation5 [shape = 'u8[16384]{0}', space=vmem, size = 0x4000, scoped, tag = 'input window, operand 3']
    #allocation6 [shape = 's32[2]{0}', space=sflag, size = 0x8, scoped, tag = 'scoped memory for tpu_custom_call.1']
    #allocation7 [shape = 'u8[16384]{0}', space=vmem, size = 0x4000, scoped, tag = 'input window, operand 4, single buffered']
    #allocation8 [shape = 'u8[16384]{0}', space=vmem, size = 0x4000, scoped, tag = 'input window, operand 5, single buffered']
    #allocation9 [shape = 's32[1]{0}', space=sflag, size = 0x4, scoped, tag = 'scoped memory for tpu_custom_call.1']
    #allocation10 [shape = 'u8[16384]{0}', space=vmem, size = 0x4000, scoped, tag = 'input window, operand 6, single buffered']
    #allocation11 [shape = 'u8[16384]{0}', space=vmem, size = 0x4000, scoped, tag = 'output window, operand 0']
    %13 = vsyncpa [#allocation3], 0
    %s14 = scalar_lea.sflag [#allocation3], 1
    %15 = vsyncpa %s14, 0
    %16 = vsyncpa [#allocation6], 0
    %s17 = scalar_lea.sflag [#allocation6], 1
    %18 = vsyncpa %s17, 0
    %19 = vsyncpa [#allocation9], 0
    %20 = vsyncpa [#allocation4], 0
    %s21 = scalar_lea.sflag [#allocation4], 1
    %22 = vsyncpa %s21, 0
    loop: start=0, step=1, limit=4
    $region2: #{tpu_custom_call.1} parent=1 // loop_pre_header
      _
    $region3: #{tpu_custom_call.1} parent=1 // loop_header
      %s24 = sphi 0, %s28
      %p25 = scmp.ge.s32.totalorder %s24, 4
      %s31 = sphi 0, %s43
      %s32 = sphi 0, %s39
      %s33 = sphi 0, %s31
      %s34 = sphi 0, %s32
      %s35 = sphi 0, %s33
      %s36 = sphi 0, %s34
      %s46 = sphi 0, %s48
      %s49 = sphi 0, %s46
      %s50 = sphi 0, %s49
      %s66 = sphi 0, %s50
      %s74 = sphi 0, %s76
      %s77 = sphi 0, %s74
      %s78 = sphi 0, %s77
      %s94 = sphi 0, %s78
      %s102 = sphi 0, %s104
      %s105 = sphi 0, %s102
      %s106 = sphi 0, %s105
      %s122 = sphi 0, %s106
      %s130 = sphi 0, %s132
      %s133 = sphi 0, %s130
      %s134 = sphi 0, %s133
      %s150 = sphi 0, %s134
      %s154 = sphi 0, %s154
      %s156 = sphi 0, %s154
      %s157 = sphi 0, %s156
      %s171 = sphi 0, %s157
      %s175 = sphi 0, %s175
      %s177 = sphi 0, %s175
      %s178 = sphi 0, %s177
      %s192 = sphi 0, %s178
      %s196 = sphi 0, %s196
      %s198 = sphi 0, %s196
      %s199 = sphi 0, %s198
      %s213 = sphi 0, %s199
      %s217 = sphi 0, %s217
      %s219 = sphi 0, %s217
      %s220 = sphi 0, %s219
      %s234 = sphi 0, %s220
      %s242 = sphi 0, %s244
      %s245 = sphi 0, %s242
      %s246 = sphi 0, %s245
      %s262 = sphi 0, %s246
    $region4: #{tpu_custom_call.1} parent=1 // loop_header_branch
      %27 = sbr.rel (%p25) target = $region8
    $region5: #{tpu_custom_call.1} parent=1 // loop_body
      %s29 = ssub.s32 %s24, 1
      %s30 = ssub.s32 %s24, 2
      %s37 = sadd.s32 1, %s32
      %p38 = scmp.ge.s32.totalorder %s37, 1
      %s39 = scalar_select %p38, 0, %s37
      %s40 = sadd.s32 1, %s31
      %s41 = scalar_select %p38, %s40, %s31
      %p42 = scmp.ge.s32.totalorder %s41, 2
      %s43 = scalar_select %p42, 0, %s41
      %s44 = ssub.s32 %s31, %s43
      %p45 = scmp.eq.s32.totalorder %s44, 0
      %s47 = sadd.s32 %s46, 1
      %s48 = scalar_select %p45, %s46, %s47
      %p51 = pneg %p45
      %p52 = scmp.eq.s32.totalorder %s24, 1
      %p53 = por %p51, %p52
      %p54 = scmp.ne.s32.totalorder %s46, %s49
      %p55 = scmp.eq.s32.totalorder %s24, 0
      %p56 = por %p54, %p55
      %p57 = scmp.ne.s32.totalorder %s46, %s49
      %p58 = scmp.eq.s32.totalorder %s29, 1
      %p59 = por %p57, %p58
      %p60 = scmp.ne.s32.totalorder %s49, %s50
      %p61 = scmp.eq.s32.totalorder %s29, 0
      %p62 = por %p60, %p61
      %p63 = scmp.ne.s32.totalorder %s49, %s50
      %p64 = scmp.eq.s32.totalorder %s30, 1
      %p65 = por %p63, %p64
      %p67 = scmp.ne.s32.totalorder %s50, %s66
      %p68 = scmp.eq.s32.totalorder %s30, 0
      %p69 = por %p67, %p68
      %s70 = ssub.s32 %s31, %s43
      %s71 = ssub.s32 %s32, %s39
      %s72 = sor.u32 %s70, %s71
      %p73 = scmp.eq.s32.totalorder %s72, 0
      %s75 = sadd.s32 %s74, 1
      %s76 = scalar_select %p73, %s74, %s75
      %p79 = pneg %p73
      %p80 = scmp.eq.s32.totalorder %s24, 1
      %p81 = por %p79, %p80
      %p82 = scmp.ne.s32.totalorder %s74, %s77
      %p83 = scmp.eq.s32.totalorder %s24, 0
      %p84 = por %p82, %p83
      %p85 = scmp.ne.s32.totalorder %s74, %s77
      %p86 = scmp.eq.s32.totalorder %s29, 1
      %p87 = por %p85, %p86
      %p88 = scmp.ne.s32.totalorder %s77, %s78
      %p89 = scmp.eq.s32.totalorder %s29, 0
      %p90 = por %p88, %p89
      %p91 = scmp.ne.s32.totalorder %s77, %s78
      %p92 = scmp.eq.s32.totalorder %s30, 1
      %p93 = por %p91, %p92
      %p95 = scmp.ne.s32.totalorder %s78, %s94
      %p96 = scmp.eq.s32.totalorder %s30, 0
      %p97 = por %p95, %p96
      %s98 = ssub.s32 %s31, %s43
      %s99 = ssub.s32 %s32, %s39
      %s100 = sor.u32 %s98, %s99
      %p101 = scmp.eq.s32.totalorder %s100, 0
      %s103 = sadd.s32 %s102, 1
      %s104 = scalar_select %p101, %s102, %s103
      %p107 = pneg %p101
      %p108 = scmp.eq.s32.totalorder %s24, 1
      %p109 = por %p107, %p108
      %p110 = scmp.ne.s32.totalorder %s102, %s105
      %p111 = scmp.eq.s32.totalorder %s24, 0
      %p112 = por %p110, %p111
      %p113 = scmp.ne.s32.totalorder %s102, %s105
      %p114 = scmp.eq.s32.totalorder %s29, 1
      %p115 = por %p113, %p114
      %p116 = scmp.ne.s32.totalorder %s105, %s106
      %p117 = scmp.eq.s32.totalorder %s29, 0
      %p118 = por %p116, %p117
      %p119 = scmp.ne.s32.totalorder %s105, %s106
      %p120 = scmp.eq.s32.totalorder %s30, 1
      %p121 = por %p119, %p120
      %p123 = scmp.ne.s32.totalorder %s106, %s122
      %p124 = scmp.eq.s32.totalorder %s30, 0
      %p125 = por %p123, %p124
      %s126 = ssub.s32 %s31, %s43
      %s127 = ssub.s32 %s32, %s39
      %s128 = sor.u32 %s126, %s127
      %p129 = scmp.eq.s32.totalorder %s128, 0
      %s131 = sadd.s32 %s130, 1
      %s132 = scalar_select %p129, %s130, %s131
      %p135 = pneg %p129
      %p136 = scmp.eq.s32.totalorder %s24, 1
      %p137 = por %p135, %p136
      %p138 = scmp.ne.s32.totalorder %s130, %s133
      %p139 = scmp.eq.s32.totalorder %s24, 0
      %p140 = por %p138, %p139
      %p141 = scmp.ne.s32.totalorder %s130, %s133
      %p142 = scmp.eq.s32.totalorder %s29, 1
      %p143 = por %p141, %p142
      %p144 = scmp.ne.s32.totalorder %s133, %s134
      %p145 = scmp.eq.s32.totalorder %s29, 0
      %p146 = por %p144, %p145
      %p147 = scmp.ne.s32.totalorder %s133, %s134
      %p148 = scmp.eq.s32.totalorder %s30, 1
      %p149 = por %p147, %p148
      %p151 = scmp.ne.s32.totalorder %s134, %s150
      %p152 = scmp.eq.s32.totalorder %s30, 0
      %p153 = por %p151, %p152
      %s155 = sadd.s32 %s154, 1
      %p158 = scmp.eq.s32.totalorder %s24, 1
      %p159 = scmp.ne.s32.totalorder %s154, %s156
      %p160 = scmp.eq.s32.totalorder %s24, 0
      %p161 = por %p159, %p160
      %p162 = scmp.ne.s32.totalorder %s154, %s156
      %p163 = scmp.eq.s32.totalorder %s29, 1
      %p164 = por %p162, %p163
      %p165 = scmp.ne.s32.totalorder %s156, %s157
      %p166 = scmp.eq.s32.totalorder %s29, 0
      %p167 = por %p165, %p166
      %p168 = scmp.ne.s32.totalorder %s156, %s157
      %p169 = scmp.eq.s32.totalorder %s30, 1
      %p170 = por %p168, %p169
      %p172 = scmp.ne.s32.totalorder %s157, %s171
      %p173 = scmp.eq.s32.totalorder %s30, 0
      %p174 = por %p172, %p173
      %s176 = sadd.s32 %s175, 1
      %p179 = scmp.eq.s32.totalorder %s24, 1
      %p180 = scmp.ne.s32.totalorder %s175, %s177
      %p181 = scmp.eq.s32.totalorder %s24, 0
      %p182 = por %p180, %p181
      %p183 = scmp.ne.s32.totalorder %s175, %s177
      %p184 = scmp.eq.s32.totalorder %s29, 1
      %p185 = por %p183, %p184
      %p186 = scmp.ne.s32.totalorder %s177, %s178
      %p187 = scmp.eq.s32.totalorder %s29, 0
      %p188 = por %p186, %p187
      %p189 = scmp.ne.s32.totalorder %s177, %s178
      %p190 = scmp.eq.s32.totalorder %s30, 1
      %p191 = por %p189, %p190
      %p193 = scmp.ne.s32.totalorder %s178, %s192
      %p194 = scmp.eq.s32.totalorder %s30, 0
      %p195 = por %p193, %p194
      %s197 = sadd.s32 %s196, 1
      %p200 = scmp.eq.s32.totalorder %s24, 1
      %p201 = scmp.ne.s32.totalorder %s196, %s198
      %p202 = scmp.eq.s32.totalorder %s24, 0
      %p203 = por %p201, %p202
      %p204 = scmp.ne.s32.totalorder %s196, %s198
      %p205 = scmp.eq.s32.totalorder %s29, 1
      %p206 = por %p204, %p205
      %p207 = scmp.ne.s32.totalorder %s198, %s199
      %p208 = scmp.eq.s32.totalorder %s29, 0
      %p209 = por %p207, %p208
      %p210 = scmp.ne.s32.totalorder %s198, %s199
      %p211 = scmp.eq.s32.totalorder %s30, 1
      %p212 = por %p210, %p211
      %p214 = scmp.ne.s32.totalorder %s199, %s213
      %p215 = scmp.eq.s32.totalorder %s30, 0
      %p216 = por %p214, %p215
      %s218 = sadd.s32 %s217, 1
      %p221 = scmp.eq.s32.totalorder %s24, 1
      %p222 = scmp.ne.s32.totalorder %s217, %s219
      %p223 = scmp.eq.s32.totalorder %s24, 0
      %p224 = por %p222, %p223
      %p225 = scmp.ne.s32.totalorder %s217, %s219
      %p226 = scmp.eq.s32.totalorder %s29, 1
      %p227 = por %p225, %p226
      %p228 = scmp.ne.s32.totalorder %s219, %s220
      %p229 = scmp.eq.s32.totalorder %s29, 0
      %p230 = por %p228, %p229
      %p231 = scmp.ne.s32.totalorder %s219, %s220
      %p232 = scmp.eq.s32.totalorder %s30, 1
      %p233 = por %p231, %p232
      %p235 = scmp.ne.s32.totalorder %s220, %s234
      %p236 = scmp.eq.s32.totalorder %s30, 0
      %p237 = por %p235, %p236
      %s238 = ssub.s32 %s31, %s43
      %s239 = ssub.s32 %s32, %s39
      %s240 = sor.u32 %s238, %s239
      %p241 = scmp.eq.s32.totalorder %s240, 0
      %s243 = sadd.s32 %s242, 1
      %s244 = scalar_select %p241, %s242, %s243
      %p247 = pneg %p241
      %p248 = scmp.eq.s32.totalorder %s24, 1
      %p249 = por %p247, %p248
      %p250 = scmp.ne.s32.totalorder %s242, %s245
      %p251 = scmp.eq.s32.totalorder %s24, 0
      %p252 = por %p250, %p251
      %p253 = scmp.ne.s32.totalorder %s242, %s245
      %p254 = scmp.eq.s32.totalorder %s29, 1
      %p255 = por %p253, %p254
      %p256 = scmp.ne.s32.totalorder %s245, %s246
      %p257 = scmp.eq.s32.totalorder %s29, 0
      %p258 = por %p256, %p257
      %p259 = scmp.ne.s32.totalorder %s245, %s246
      %p260 = scmp.eq.s32.totalorder %s30, 1
      %p261 = por %p259, %p260
      %p263 = scmp.ne.s32.totalorder %s246, %s262
      %p264 = scmp.eq.s32.totalorder %s30, 0
      %p265 = por %p263, %p264
      %p266 = scmp.le.s32.totalorder 1, %s24
      %p267 = scmp.lt.s32.totalorder %s24, 3
      %p268 = pnand %p266, %p267
      %p269 = pneg %p268
      // Predicated region
      $region9: #{tpu_custom_call.1} parent=5 // pred_check
        _
      $region10: #{tpu_custom_call.1} parent=5 // pred_check_branch
        %271 = sbr.rel (%p268) target = $region12
      $region11: #{tpu_custom_call.1} parent=5 // pred_region
        %s272 = ssub.s32 %s24, 1
        // Predicated region
        $region13: #{tpu_custom_call.1} parent=11 // pred_check
          %p273 = pneg %p167
        $region14: #{tpu_custom_call.1} parent=11 // pred_check_branch
          %275 = sbr.rel (%p273) target = $region16
        $region15: #{tpu_custom_call.1} parent=11 // pred_region
          %s277 = ssub.s32 512, 512
          %278 = vsyncadd [#allocation6], %s277
          %s279 = sshll.u32 [#allocation7], 4
          %s280 = int_to_ptr.vmem [resolvable:$true] %s279
          %285 = dma.hbm_to_vmem [thread:$0]  %s4, 512, %s280, [#allocation6], 128, 128, 8
        $region16: #{tpu_custom_call.1} parent=11 // pred_fallthru
          _
        // Predicated region
        $region17: #{tpu_custom_call.1} parent=11 // pred_check
          %p286 = pneg %p188
        $region18: #{tpu_custom_call.1} parent=11 // pred_check_branch
          %288 = sbr.rel (%p286) target = $region20
        $region19: #{tpu_custom_call.1} parent=11 // pred_region
          %s290 = ssub.s32 512, 512
          %291 = vsyncadd [#allocation9], %s290
          %s292 = sshll.u32 [#allocation8], 4
          %s293 = int_to_ptr.vmem [resolvable:$true] %s292
          %298 = dma.hbm_to_vmem [thread:$0]  %s5, 512, %s293, [#allocation9], 128, 128, 8
        $region20: #{tpu_custom_call.1} parent=11 // pred_fallthru
          _
        // Predicated region
        $region21: #{tpu_custom_call.1} parent=11 // pred_check
          %p299 = pneg %p209
        $region22: #{tpu_custom_call.1} parent=11 // pred_check_branch
          %301 = sbr.rel (%p299) target = $region24
        $region23: #{tpu_custom_call.1} parent=11 // pred_region
          %s303 = ssub.s32 512, 512
          %304 = vsyncadd [#allocation9], %s303
          %s305 = sshll.u32 [#allocation10], 4
          %s306 = int_to_ptr.vmem [resolvable:$true] %s305
          %311 = dma.hbm_to_vmem [thread:$0]  %s6, 512, %s306, [#allocation9], 128, 128, 8
        $region24: #{tpu_custom_call.1} parent=11 // pred_fallthru
          _
        // Predicated region
        $region25: #{tpu_custom_call.1} parent=11 // pred_check
          %p312 = pneg %p230
        $region26: #{tpu_custom_call.1} parent=11 // pred_check_branch
          %314 = sbr.rel (%p312) target = $region28
        $region27: #{tpu_custom_call.1} parent=11 // pred_region
          _
        $region28: #{tpu_custom_call.1} parent=11 // pred_fallthru
          _
      $region12: #{tpu_custom_call.1} parent=5 // pred_fallthru
        _
      %p315 = scmp.lt.s32.totalorder %s24, 2
      // Predicated region
      $region29: #{tpu_custom_call.1} parent=5 // pred_check
        %p316 = pneg %p315
      $region30: #{tpu_custom_call.1} parent=5 // pred_check_branch
        %318 = sbr.rel (%p316) target = $region32
      $region31: #{tpu_custom_call.1} parent=5 // pred_region
        // Predicated region
        $region33: #{tpu_custom_call.1} parent=31 // pred_check
          %p319 = pneg %p56
        $region34: #{tpu_custom_call.1} parent=31 // pred_check_branch
          %321 = sbr.rel (%p319) target = $region36
        $region35: #{tpu_custom_call.1} parent=31 // pred_region
          %p322 = scmp.lt.s32.totalorder %s31, 1
          %s323 = scalar_select %p322, %s31, 1
          %s324 = smul.addr %s323, 2
          %s325 = smul.addr %s324, 8
          %s326 = scalar_lea.vmem %s0, %s325
        $region36: #{tpu_custom_call.1} parent=31 // pred_fallthru
          _
        // Predicated region
        $region37: #{tpu_custom_call.1} parent=31 // pred_check
          %p327 = pneg %p84
        $region38: #{tpu_custom_call.1} parent=31 // pred_check_branch
          %329 = sbr.rel (%p327) target = $region40
        $region39: #{tpu_custom_call.1} parent=31 // pred_region
          %s330 = sand.u32 %s74, 1
          %s331 = scalar_lea.sflag [#allocation3], %s330
          %s332 = sand.u32 %s74, 1
          %s333 = smul.addr %s332, 16
          %s334 = scalar_lea.vmem [#allocation2], %s333
          %s335 = smul.u32 2, %s32
          %s337 = ssub.s32 256, 256
          %338 = vsyncadd %s331, %s337
          %s339 = smul.addr %s31, 2
          %s340 = sadd.s32 %s335, %s339
          %s341 = smul.addr %s340, 128
          %s342 = scalar_lea.hbm %s1, %s341
          %s343 = sshll.u32 %s334, 4
          %s344 = int_to_ptr.vmem [resolvable:$true] %s343
          %349 = dma.hbm_to_vmem [thread:$0]  %s342, 256, %s344, %s331, 128, 128, 8
        $region40: #{tpu_custom_call.1} parent=31 // pred_fallthru
          _
        // Predicated region
        $region41: #{tpu_custom_call.1} parent=31 // pred_check
          %p350 = pneg %p112
        $region42: #{tpu_custom_call.1} parent=31 // pred_check_branch
          %352 = sbr.rel (%p350) target = $region44
        $region43: #{tpu_custom_call.1} parent=31 // pred_region
          %s353 = smul.u32 2, %s32
          %p354 = scmp.lt.s32.totalorder %s31, 1
          %s355 = scalar_select %p354, %s31, 1
          %p356 = scmp.lt.s32.totalorder %s353, 1
          %s357 = scalar_select %p356, %s353, 1
          %s358 = smul.addr %s355, 2
          %s359 = sadd.s32 %s357, %s358
          %s360 = smul.addr %s359, 8
          %s361 = scalar_lea.vmem %s2, %s360
          %s362 = smul.u32 2, %s32
        $region44: #{tpu_custom_call.1} parent=31 // pred_fallthru
          _
        // Predicated region
        $region45: #{tpu_custom_call.1} parent=31 // pred_check
          %p363 = pneg %p140
        $region46: #{tpu_custom_call.1} parent=31 // pred_check_branch
          %365 = sbr.rel (%p363) target = $region48
        $region47: #{tpu_custom_call.1} parent=31 // pred_region
          %s366 = sand.u32 %s24, 1
          %s367 = scalar_lea.sflag [#allocation6], %s366
          %s368 = sand.u32 %s130, 1
          %s369 = smul.addr %s368, 16
          %s370 = scalar_lea.vmem [#allocation5], %s369
          %s371 = smul.u32 2, %s32
          %s373 = ssub.s32 256, 256
          %374 = vsyncadd %s367, %s373
          %s375 = smul.addr %s31, 2
          %s376 = sadd.s32 %s371, %s375
          %s377 = smul.addr %s376, 128
          %s378 = scalar_lea.hbm %s3, %s377
          %s379 = sshll.u32 %s370, 4
          %s380 = int_to_ptr.vmem [resolvable:$true] %s379
          %385 = dma.hbm_to_vmem [thread:$0]  %s378, 256, %s380, %s367, 128, 128, 8
        $region48: #{tpu_custom_call.1} parent=31 // pred_fallthru
          _
      $region32: #{tpu_custom_call.1} parent=5 // pred_fallthru
        _
      %p386 = scmp.le.s32.totalorder 1, %s24
      %p387 = scmp.lt.s32.totalorder %s24, 3
      %p388 = pnand %p386, %p387
      %p389 = pneg %p388
      // Predicated region
      $region49: #{tpu_custom_call.1} parent=5 // pred_check
        _
      $region50: #{tpu_custom_call.1} parent=5 // pred_check_branch
        %391 = sbr.rel (%p388) target = $region52
      $region51: #{tpu_custom_call.1} parent=5 // pred_region
        %s392 = ssub.s32 %s24, 1
        %s393 = sand.u32 %s77, 1
        %s394 = scalar_lea.sflag [#allocation3], %s393
        %s395 = sand.u32 %s77, 1
        %s396 = smul.addr %s395, 16
        %s397 = scalar_lea.vmem [#allocation2], %s396
        // Predicated region
        $region53: #{tpu_custom_call.1} parent=51 // pred_check
          %p398 = pneg %p90
        $region54: #{tpu_custom_call.1} parent=51 // pred_check_branch
          %400 = sbr.rel (%p398) target = $region56
        $region55: #{tpu_custom_call.1} parent=51 // pred_region
          %401 = dma.done %s394, 256
        $region56: #{tpu_custom_call.1} parent=51 // pred_fallthru
          _
        %s402 = sand.u32 %s29, 1
        %s403 = scalar_lea.sflag [#allocation6], %s402
        %s404 = sand.u32 %s133, 1
        %s405 = smul.addr %s404, 16
        %s406 = scalar_lea.vmem [#allocation5], %s405
        // Predicated region
        $region57: #{tpu_custom_call.1} parent=51 // pred_check
          %p407 = pneg %p146
        $region58: #{tpu_custom_call.1} parent=51 // pred_check_branch
          %409 = sbr.rel (%p407) target = $region60
        $region59: #{tpu_custom_call.1} parent=51 // pred_region
          %410 = dma.done %s403, 256
        $region60: #{tpu_custom_call.1} parent=51 // pred_fallthru
          _
        // Predicated region
        $region61: #{tpu_custom_call.1} parent=51 // pred_check
          %p411 = pneg %p167
        $region62: #{tpu_custom_call.1} parent=51 // pred_check_branch
          %413 = sbr.rel (%p411) target = $region64
        $region63: #{tpu_custom_call.1} parent=51 // pred_region
          %414 = dma.done [#allocation6], 512
        $region64: #{tpu_custom_call.1} parent=51 // pred_fallthru
          _
        // Predicated region
        $region65: #{tpu_custom_call.1} parent=51 // pred_check
          %p415 = pneg %p188
        $region66: #{tpu_custom_call.1} parent=51 // pred_check_branch
          %417 = sbr.rel (%p415) target = $region68
        $region67: #{tpu_custom_call.1} parent=51 // pred_region
          %418 = dma.done [#allocation9], 512
        $region68: #{tpu_custom_call.1} parent=51 // pred_fallthru
          _
        // Predicated region
        $region69: #{tpu_custom_call.1} parent=51 // pred_check
          %p419 = pneg %p209
        $region70: #{tpu_custom_call.1} parent=51 // pred_check_branch
          %421 = sbr.rel (%p419) target = $region72
        $region71: #{tpu_custom_call.1} parent=51 // pred_region
          %422 = dma.done [#allocation9], 512
        $region72: #{tpu_custom_call.1} parent=51 // pred_fallthru
          _
        %p423 = scmp.lt.s32.totalorder %s33, 1
        %s424 = scalar_select %p423, %s33, 1
        %s425 = smul.addr %s424, 2
        %s426 = smul.addr %s425, 8
        %s427 = scalar_lea.vmem %s0, %s426
        %p428 = pneg %p62
        %p429 = pneg %p59
        %s430 = sand.u32 %s77, 1
        %s431 = scalar_lea.sflag [#allocation3], %s430
        %s432 = sand.u32 %s77, 1
        %s433 = smul.addr %s432, 16
        %s434 = scalar_lea.vmem [#allocation2], %s433
        %p435 = pneg %p90
        %p436 = pneg %p87
        %s437 = smul.u32 2, %s34
        %p438 = scmp.lt.s32.totalorder %s33, 1
        %s439 = scalar_select %p438, %s33, 1
        %p440 = scmp.lt.s32.totalorder %s437, 1
        %s441 = scalar_select %p440, %s437, 1
        %s442 = smul.addr %s439, 2
        %s443 = sadd.s32 %s441, %s442
        %s444 = smul.addr %s443, 8
        %s445 = scalar_lea.vmem %s2, %s444
        %p446 = pneg %p118
        %p447 = pneg %p115
        %s448 = sand.u32 %s29, 1
        %s449 = scalar_lea.sflag [#allocation6], %s448
        %s450 = sand.u32 %s133, 1
        %s451 = smul.addr %s450, 16
        %s452 = scalar_lea.vmem [#allocation5], %s451
        %p453 = pneg %p146
        %p454 = pneg %p143
        %p455 = pneg %p167
        %p456 = pneg %p164
        %p457 = pneg %p188
        %p458 = pneg %p185
        %p459 = pneg %p209
        %p460 = pneg %p206
        %p461 = pneg %p230
        %p462 = pneg %p227
        %p463 = pneg %p258
        %p464 = pneg %p255
        %s465 = sand.u32 %s245, 1
        %s466 = scalar_lea.sflag [#allocation4], %s465
        %s467 = sand.u32 %s245, 1
        %s468 = smul.addr %s467, 16
        %s469 = scalar_lea.vmem [#allocation11], %s468
        %p470 = scmp.lt.s32.totalorder %s33, 1
        %s471 = scalar_select %p470, %s33, 1
        %s472 = smul.addr %s471, 2
        %s473 = smul.addr %s472, 8
        %s474 = scalar_lea.vmem %s0, %s473
        %s475 = smul.u32 2, %s34
        %s476 = smul.u32 2, %s34
        %p477 = scmp.lt.s32.totalorder %s33, 1
        %s478 = scalar_select %p477, %s33, 1
        %p479 = scmp.lt.s32.totalorder %s476, 1
        %s480 = scalar_select %p479, %s476, 1
        %s481 = smul.addr %s478, 2
        %s482 = sadd.s32 %s480, %s481
        %s483 = smul.addr %s482, 8
        %s484 = scalar_lea.vmem %s2, %s483
        %s485 = smul.u32 2, %s34
        %s486 = smul.u32 2, %s34
        %s487 = smul.u32 2, %s34
        %v488 = vld [vmem:[%s474] sm:$0xff]
        %v489 = vld [vmem:[%s474 + $0x8] sm:$0xff]
        %v490 = vld [vmem:[%s397] sm:$0xff]
        %v491 = vld [vmem:[%s397 + $0x8] sm:$0xff]
        %v492 = vld [vmem:[%s484] sm:$0xff]
        %v493 = vld [vmem:[%s484 + $0x8] sm:$0xff]
        %v494 = vlaneseq
        %v495 = vand.u32 %v494, 127
        %496 = vset.pattern.permute.xlu0 0
        %497 = vperm.xlu0 %496, %v492
        %v498 = vpop.permute.xlu0 %497
        %499 = vset.pattern.permute.xlu0 0
        %500 = vperm.xlu0 %499, %v493
        %v501 = vpop.permute.xlu0 %500
        %vm502 = vcmp.eq.s32.totalorder %v498, %v495
        %vm503 = vcmp.eq.s32.totalorder %v501, %v495
        %v504 = vsel %vm502, 1, 0
        %v505 = vsel %vm503, 1, 0
        %v506 = vcvt.s32.f32 %v504
        %v507 = vcvt.s32.f32 %v505
        %v508 = vadd.f32 %v506, 0.0
        %v509 = vadd.f32 %v507, 0.0
        %510 = vset.pattern.permute.xlu0 1
        %511 = vperm.xlu0 %510, %v492
        %v512 = vpop.permute.xlu0 %511
        %513 = vset.pattern.permute.xlu0 1
        %514 = vperm.xlu0 %513, %v493
        %v515 = vpop.permute.xlu0 %514
        %vm516 = vcmp.eq.s32.totalorder %v512, %v495
        %vm517 = vcmp.eq.s32.totalorder %v515, %v495
        %v518 = vsel %vm516, 1, 0
        %v519 = vsel %vm517, 1, 0
        %v520 = vcvt.s32.f32 %v518
        %v521 = vcvt.s32.f32 %v519
        %v522 = vadd.f32 %v508, %v520
        %v523 = vadd.f32 %v509, %v521
        %524 = vset.pattern.permute.xlu0 2
        %525 = vperm.xlu0 %524, %v492
        %v526 = vpop.permute.xlu0 %525
        %527 = vset.pattern.permute.xlu0 2
        %528 = vperm.xlu0 %527, %v493
        %v529 = vpop.permute.xlu0 %528
        %vm530 = vcmp.eq.s32.totalorder %v526, %v495
        %vm531 = vcmp.eq.s32.totalorder %v529, %v495
        %v532 = vsel %vm530, 1, 0
        %v533 = vsel %vm531, 1, 0
        %v534 = vcvt.s32.f32 %v532
        %v535 = vcvt.s32.f32 %v533
        %v536 = vadd.f32 %v522, %v534
        %v537 = vadd.f32 %v523, %v535
        %538 = vset.pattern.permute.xlu0 3
        %539 = vperm.xlu0 %538, %v492
        %v540 = vpop.permute.xlu0 %539
        %541 = vset.pattern.permute.xlu0 3
        %542 = vperm.xlu0 %541, %v493
        %v543 = vpop.permute.xlu0 %542
        %vm544 = vcmp.eq.s32.totalorder %v540, %v495
        %vm545 = vcmp.eq.s32.totalorder %v543, %v495
        %v546 = vsel %vm544, 1, 0
        %v547 = vsel %vm545, 1, 0
        %v548 = vcvt.s32.f32 %v546
        %v549 = vcvt.s32.f32 %v547
        %v550 = vadd.f32 %v536, %v548
        %v551 = vadd.f32 %v537, %v549
        %vm552 = vcmask 130048
        %v554 = vsel %vm552, %v550, 0
        %v557 = vsel %vm552, %v551, 0
        %559 = vmatprep.subr.mxu0 0.0
        %560 = vmatpush1.msra.mxu0 %v488
        %561 = vmatprep.subr.mxu0 0.0
        %562 = vmatpush1.msra.mxu0 %v489
        %563 = vmatprep.subr.mxu0 0.0
        %564 = vmatpush1.msra.mxu0 0.0
        %565 = vmatprep.subr.mxu0 0.0
        %566 = vmatpush1.msra.mxu0 0.0
        %567 = vmatprep.subr.mxu0 0.0
        %568 = vmatpush1.msra.mxu0 0.0
        %569 = vmatprep.subr.mxu0 0.0
        %570 = vmatpush1.msra.mxu0 0.0
        %571 = vmatprep.subr.mxu0 0.0
        %572 = vmatpush1.msra.mxu0 0.0
        %573 = vmatprep.subr.mxu0 0.0
        %574 = vmatpush1.msra.mxu0 0.0
        %575 = vmatprep.subr.mxu0 0.0
        %576 = vmatpush1.msra.mxu0 0.0
        %577 = vmatprep.subr.mxu0 0.0
        %578 = vmatpush1.msra.mxu0 0.0
        %579 = vmatprep.subr.mxu0 0.0
        %580 = vmatpush1.msra.mxu0 0.0
        %581 = vmatprep.subr.mxu0 0.0
        %582 = vmatpush1.msra.mxu0 0.0
        %583 = vmatprep.subr.mxu0 0.0
        %584 = vmatpush1.msra.mxu0 0.0
        %585 = vmatprep.subr.mxu0 0.0
        %586 = vmatpush1.msra.mxu0 0.0
        %587 = vmatprep.subr.mxu0 0.0
        %588 = vmatpush1.msra.mxu0 0.0
        %589 = vmatprep.subr.mxu0 0.0
        %590 = vmatpush1.msra.mxu0 0.0
        %591 = vmatprep.subr.mxu0 0.0
        %592 = vmatpush1.msra.mxu0 0.0
        %593 = vmatprep.subr.mxu0 0.0
        %594 = vmatpush1.msra.mxu0 0.0
        %595 = vmatprep.subr.mxu0 0.0
        %596 = vmatpush1.msra.mxu0 0.0
        %597 = vmatprep.subr.mxu0 0.0
        %598 = vmatpush1.msra.mxu0 0.0
        %599 = vmatprep.subr.mxu0 0.0
        %600 = vmatpush1.msra.mxu0 0.0
        %601 = vmatprep.subr.mxu0 0.0
        %602 = vmatpush1.msra.mxu0 0.0
        %603 = vmatprep.subr.mxu0 0.0
        %604 = vmatpush1.msra.mxu0 0.0
        %605 = vmatprep.subr.mxu0 0.0
        %606 = vmatpush1.msra.mxu0 0.0
        %607 = vmatprep.subr.mxu0 0.0
        %608 = vmatpush1.msra.mxu0 0.0
        %609 = vmatprep.subr.mxu0 0.0
        %610 = vmatpush1.msra.mxu0 0.0
        %611 = vmatprep.subr.mxu0 0.0
        %612 = vmatpush1.msra.mxu0 0.0
        %613 = vmatprep.subr.mxu0 0.0
        %614 = vmatpush1.msra.mxu0 0.0
        %615 = vmatprep.subr.mxu0 0.0
        %616 = vmatpush1.msra.mxu0 0.0
        %617 = vmatprep.subr.mxu0 0.0
        %618 = vmatpush1.msra.mxu0 0.0
        %619 = vmatprep.subr.mxu0 0.0
        %620 = vmatpush1.msra.mxu0 0.0
        %621 = vmatprep.subr.mxu0 0.0
        %622 = vmatpush1.msra.mxu0 0.0
        %623 = vmatprep.mubr.f32.mxu0 0.0
        %624 = vmatmul.mubr.f32.gmra.mrb[0].mxu0 %v554
        %v625 = vpop.f32.mrb[0].mxu0
        %v626 = vadd.f32 0.0, %v625
        %v627 = vpop.f32.mrb[0].mxu0
        %628 = vmatprep.mubr.f32.mxu0 0.0
        %629 = vmatmul.mubr.f32.gmra.mrb[0].mxu0 %v557
        %v630 = vpop.f32.mrb[0].mxu0
        %v631 = vadd.f32 0.0, %v630
        %v632 = vpop.f32.mrb[0].mxu0
        %633 = vdwg.mxu0
        %v634 = vld [vmem:[#allocation7] sm:$0xff]
        %v635 = vld [vmem:[#allocation7 + $0x8] sm:$0xff]
        %v636 = vld [vmem:[#allocation7 + $0x10] sm:$0xff]
        %v637 = vld [vmem:[#allocation7 + $0x18] sm:$0xff]
        %v638 = vld [vmem:[#allocation8] sm:$0xff]
        %v639 = vld [vmem:[#allocation8 + $0x8] sm:$0xff]
        %v640 = vld [vmem:[#allocation8 + $0x10] sm:$0xff]
        %v641 = vld [vmem:[#allocation8 + $0x18] sm:$0xff]
        %vm642 = vcmask 261120
        %v644 = vsel %vm642, %v490, 0
        %v647 = vsel %vm642, %v491, 0
        %649 = vmatprep.subr.mxu0 0.0
        %650 = vmatpush1.msra.mxu0 %v638
        %651 = vmatprep.subr.mxu0 0.0
        %652 = vmatpush1.msra.mxu0 %v639
        %653 = vmatprep.subr.mxu0 0.0
        %654 = vmatpush1.msra.mxu0 %v640
        %655 = vmatprep.subr.mxu0 0.0
        %656 = vmatpush1.msra.mxu0 %v641
        %657 = vmatprep.subr.mxu0 0.0
        %658 = vmatpush1.msra.mxu0 0.0
        %659 = vmatprep.subr.mxu0 0.0
        %660 = vmatpush1.msra.mxu0 0.0
        %661 = vmatprep.subr.mxu0 0.0
        %662 = vmatpush1.msra.mxu0 0.0
        %663 = vmatprep.subr.mxu0 0.0
        %664 = vmatpush1.msra.mxu0 0.0
        %665 = vmatprep.subr.mxu0 0.0
        %666 = vmatpush1.msra.mxu0 0.0
        %667 = vmatprep.subr.mxu0 0.0
        %668 = vmatpush1.msra.mxu0 0.0
        %669 = vmatprep.subr.mxu0 0.0
        %670 = vmatpush1.msra.mxu0 0.0
        %671 = vmatprep.subr.mxu0 0.0
        %672 = vmatpush1.msra.mxu0 0.0
        %673 = vmatprep.subr.mxu0 0.0
        %674 = vmatpush1.msra.mxu0 0.0
        %675 = vmatprep.subr.mxu0 0.0
        %676 = vmatpush1.msra.mxu0 0.0
        %677 = vmatprep.subr.mxu0 0.0
        %678 = vmatpush1.msra.mxu0 0.0
        %679 = vmatprep.subr.mxu0 0.0
        %680 = vmatpush1.msra.mxu0 0.0
        %681 = vmatprep.subr.mxu0 0.0
        %682 = vmatpush1.msra.mxu0 0.0
        %683 = vmatprep.subr.mxu0 0.0
        %684 = vmatpush1.msra.mxu0 0.0
        %685 = vmatprep.subr.mxu0 0.0
        %686 = vmatpush1.msra.mxu0 0.0
        %687 = vmatprep.subr.mxu0 0.0
        %688 = vmatpush1.msra.mxu0 0.0
        %689 = vmatprep.subr.mxu0 0.0
        %690 = vmatpush1.msra.mxu0 0.0
        %691 = vmatprep.subr.mxu0 0.0
        %692 = vmatpush1.msra.mxu0 0.0
        %693 = vmatprep.subr.mxu0 0.0
        %694 = vmatpush1.msra.mxu0 0.0
        %695 = vmatprep.subr.mxu0 0.0
        %696 = vmatpush1.msra.mxu0 0.0
        %697 = vmatprep.subr.mxu0 0.0
        %698 = vmatpush1.msra.mxu0 0.0
        %699 = vmatprep.subr.mxu0 0.0
        %700 = vmatpush1.msra.mxu0 0.0
        %701 = vmatprep.subr.mxu0 0.0
        %702 = vmatpush1.msra.mxu0 0.0
        %703 = vmatprep.subr.mxu0 0.0
        %704 = vmatpush1.msra.mxu0 0.0
        %705 = vmatprep.subr.mxu0 0.0
        %706 = vmatpush1.msra.mxu0 0.0
        %707 = vmatprep.subr.mxu0 0.0
        %708 = vmatpush1.msra.mxu0 0.0
        %709 = vmatprep.subr.mxu0 0.0
        %710 = vmatpush1.msra.mxu0 0.0
        %711 = vmatprep.subr.mxu0 0.0
        %712 = vmatpush1.msra.mxu0 0.0
        %713 = vmatprep.mubr.f32.mxu0 0.0
        %714 = vmatmul.mubr.f32.gmra.mrb[0].mxu0 %v644
        %v715 = vpop.f32.mrb[0].mxu0
        %v716 = vadd.f32 0.0, %v715
        %v717 = vpop.f32.mrb[0].mxu0
        %718 = vmatprep.mubr.f32.mxu0 0.0
        %719 = vmatmul.mubr.f32.gmra.mrb[0].mxu0 %v647
        %v720 = vpop.f32.mrb[0].mxu0
        %v721 = vadd.f32 0.0, %v720
        %v722 = vpop.f32.mrb[0].mxu0
        %723 = vdwg.mxu0
        %v725 = vsel %vm642, %v626, 0
        %v728 = vsel %vm642, %v631, 0
        %730 = vmatprep.subr.mxu0 0.0
        %731 = vmatpush1.msra.mxu0 %v634
        %732 = vmatprep.subr.mxu0 0.0
        %733 = vmatpush1.msra.mxu0 %v635
        %734 = vmatprep.subr.mxu0 0.0
        %735 = vmatpush1.msra.mxu0 %v636
        %736 = vmatprep.subr.mxu0 0.0
        %737 = vmatpush1.msra.mxu0 %v637
        %738 = vmatprep.subr.mxu0 0.0
        %739 = vmatpush1.msra.mxu0 0.0
        %740 = vmatprep.subr.mxu0 0.0
        %741 = vmatpush1.msra.mxu0 0.0
        %742 = vmatprep.subr.mxu0 0.0
        %743 = vmatpush1.msra.mxu0 0.0
        %744 = vmatprep.subr.mxu0 0.0
        %745 = vmatpush1.msra.mxu0 0.0
        %746 = vmatprep.subr.mxu0 0.0
        %747 = vmatpush1.msra.mxu0 0.0
        %748 = vmatprep.subr.mxu0 0.0
        %749 = vmatpush1.msra.mxu0 0.0
        %750 = vmatprep.subr.mxu0 0.0
        %751 = vmatpush1.msra.mxu0 0.0
        %752 = vmatprep.subr.mxu0 0.0
        %753 = vmatpush1.msra.mxu0 0.0
        %754 = vmatprep.subr.mxu0 0.0
        %755 = vmatpush1.msra.mxu0 0.0
        %756 = vmatprep.subr.mxu0 0.0
        %757 = vmatpush1.msra.mxu0 0.0
        %758 = vmatprep.subr.mxu0 0.0
        %759 = vmatpush1.msra.mxu0 0.0
        %760 = vmatprep.subr.mxu0 0.0
        %761 = vmatpush1.msra.mxu0 0.0
        %762 = vmatprep.subr.mxu0 0.0
        %763 = vmatpush1.msra.mxu0 0.0
        %764 = vmatprep.subr.mxu0 0.0
        %765 = vmatpush1.msra.mxu0 0.0
        %766 = vmatprep.subr.mxu0 0.0
        %767 = vmatpush1.msra.mxu0 0.0
        %768 = vmatprep.subr.mxu0 0.0
        %769 = vmatpush1.msra.mxu0 0.0
        %770 = vmatprep.subr.mxu0 0.0
        %771 = vmatpush1.msra.mxu0 0.0
        %772 = vmatprep.subr.mxu0 0.0
        %773 = vmatpush1.msra.mxu0 0.0
        %774 = vmatprep.subr.mxu0 0.0
        %775 = vmatpush1.msra.mxu0 0.0
        %776 = vmatprep.subr.mxu0 0.0
        %777 = vmatpush1.msra.mxu0 0.0
        %778 = vmatprep.subr.mxu0 0.0
        %779 = vmatpush1.msra.mxu0 0.0
        %780 = vmatprep.subr.mxu0 0.0
        %781 = vmatpush1.msra.mxu0 0.0
        %782 = vmatprep.subr.mxu0 0.0
        %783 = vmatpush1.msra.mxu0 0.0
        %784 = vmatprep.subr.mxu0 0.0
        %785 = vmatpush1.msra.mxu0 0.0
        %786 = vmatprep.subr.mxu0 0.0
        %787 = vmatpush1.msra.mxu0 0.0
        %788 = vmatprep.subr.mxu0 0.0
        %789 = vmatpush1.msra.mxu0 0.0
        %790 = vmatprep.subr.mxu0 0.0
        %791 = vmatpush1.msra.mxu0 0.0
        %792 = vmatprep.subr.mxu0 0.0
        %793 = vmatpush1.msra.mxu0 0.0
        %794 = vmatprep.mubr.f32.mxu0 0.0
        %795 = vmatmul.mubr.f32.gmra.mrb[0].mxu0 %v725
        %v796 = vpop.f32.mrb[0].mxu0
        %v797 = vadd.f32 %v716, %v796
        %v798 = vpop.f32.mrb[0].mxu0
        %799 = vmatprep.mubr.f32.mxu0 0.0
        %800 = vmatmul.mubr.f32.gmra.mrb[0].mxu0 %v728
        %v801 = vpop.f32.mrb[0].mxu0
        %v802 = vadd.f32 %v721, %v801
        %v803 = vpop.f32.mrb[0].mxu0
        %804 = vdwg.mxu0
        %v805 = vld [vmem:[%s406] sm:$0xff]
        %v806 = vld [vmem:[%s406 + $0x8] sm:$0xff]
        %v807 = vld [vmem:[#allocation10] sm:$0xff]
        %v808 = vld [vmem:[#allocation10 + $0x8] sm:$0xff]
        %v809 = vld [vmem:[#allocation10 + $0x10] sm:$0xff]
        %v810 = vld [vmem:[#allocation10 + $0x18] sm:$0xff]
        %v812 = vsel %vm642, %v805, 0
        %v815 = vsel %vm642, %v806, 0
        %817 = vmatprep.subr.mxu0 0.0
        %818 = vmatpush1.msra.mxu0 %v807
        %819 = vmatprep.subr.mxu0 0.0
        %820 = vmatpush1.msra.mxu0 %v808
        %821 = vmatprep.subr.mxu0 0.0
        %822 = vmatpush1.msra.mxu0 %v809
        %823 = vmatprep.subr.mxu0 0.0
        %824 = vmatpush1.msra.mxu0 %v810
        %825 = vmatprep.subr.mxu0 0.0
        %826 = vmatpush1.msra.mxu0 0.0
        %827 = vmatprep.subr.mxu0 0.0
        %828 = vmatpush1.msra.mxu0 0.0
        %829 = vmatprep.subr.mxu0 0.0
        %830 = vmatpush1.msra.mxu0 0.0
        %831 = vmatprep.subr.mxu0 0.0
        %832 = vmatpush1.msra.mxu0 0.0
        %833 = vmatprep.subr.mxu0 0.0
        %834 = vmatpush1.msra.mxu0 0.0
        %835 = vmatprep.subr.mxu0 0.0
        %836 = vmatpush1.msra.mxu0 0.0
        %837 = vmatprep.subr.mxu0 0.0
        %838 = vmatpush1.msra.mxu0 0.0
        %839 = vmatprep.subr.mxu0 0.0
        %840 = vmatpush1.msra.mxu0 0.0
        %841 = vmatprep.subr.mxu0 0.0
        %842 = vmatpush1.msra.mxu0 0.0
        %843 = vmatprep.subr.mxu0 0.0
        %844 = vmatpush1.msra.mxu0 0.0
        %845 = vmatprep.subr.mxu0 0.0
        %846 = vmatpush1.msra.mxu0 0.0
        %847 = vmatprep.subr.mxu0 0.0
        %848 = vmatpush1.msra.mxu0 0.0
        %849 = vmatprep.subr.mxu0 0.0
        %850 = vmatpush1.msra.mxu0 0.0
        %851 = vmatprep.subr.mxu0 0.0
        %852 = vmatpush1.msra.mxu0 0.0
        %853 = vmatprep.subr.mxu0 0.0
        %854 = vmatpush1.msra.mxu0 0.0
        %855 = vmatprep.subr.mxu0 0.0
        %856 = vmatpush1.msra.mxu0 0.0
        %857 = vmatprep.subr.mxu0 0.0
        %858 = vmatpush1.msra.mxu0 0.0
        %859 = vmatprep.subr.mxu0 0.0
        %860 = vmatpush1.msra.mxu0 0.0
        %861 = vmatprep.subr.mxu0 0.0
        %862 = vmatpush1.msra.mxu0 0.0
        %863 = vmatprep.subr.mxu0 0.0
        %864 = vmatpush1.msra.mxu0 0.0
        %865 = vmatprep.subr.mxu0 0.0
        %866 = vmatpush1.msra.mxu0 0.0
        %867 = vmatprep.subr.mxu0 0.0
        %868 = vmatpush1.msra.mxu0 0.0
        %869 = vmatprep.subr.mxu0 0.0
        %870 = vmatpush1.msra.mxu0 0.0
        %871 = vmatprep.subr.mxu0 0.0
        %872 = vmatpush1.msra.mxu0 0.0
        %873 = vmatprep.subr.mxu0 0.0
        %874 = vmatpush1.msra.mxu0 0.0
        %875 = vmatprep.subr.mxu0 0.0
        %876 = vmatpush1.msra.mxu0 0.0
        %877 = vmatprep.subr.mxu0 0.0
        %878 = vmatpush1.msra.mxu0 0.0
        %879 = vmatprep.subr.mxu0 0.0
        %880 = vmatpush1.msra.mxu0 0.0
        %881 = vmatprep.mubr.f32.mxu0 0.0
        %882 = vmatmul.mubr.f32.gmra.mrb[0].mxu0 %v812
        %v883 = vpop.f32.mrb[0].mxu0
        %v884 = vadd.f32 0.0, %v883
        %v885 = vpop.f32.mrb[0].mxu0
        %886 = vmatprep.mubr.f32.mxu0 0.0
        %887 = vmatmul.mubr.f32.gmra.mrb[0].mxu0 %v815
        %v888 = vpop.f32.mrb[0].mxu0
        %v889 = vadd.f32 0.0, %v888
        %v890 = vpop.f32.mrb[0].mxu0
        %891 = vdwg.mxu0
        %v892 = vadd.f32 %v797, %v884
        %v893 = vadd.f32 %v802, %v889
        %v894 = vld [vmem:[%s7] sm:$0x1]
        %v896 = vlaneseq
        %v897 = vshrl.u32 %v896, 7
        %v898 = vsub.s32 0, %v897
        %v899 = vrot.slane %v894, %v898
        %v901 = vadd.f32 %v892, %v899
        %v902 = vadd.f32 %v893, %v899
        %v903 = vmax.f32 %v901, 0.0
        %v904 = vmax.f32 %v902, 0.0
        %905 = vst.msk [vmem:[%s469] sm:$0xff] %vm642, %v903
        %906 = vst.msk [vmem:[%s469 + $0x8] sm:$0xff] %vm642, %v904
        %s907 = sand.u32 %s245, 1
        %s908 = scalar_lea.sflag [#allocation4], %s907
        %s909 = sand.u32 %s245, 1
        %s910 = smul.addr %s909, 16
        %s911 = scalar_lea.vmem [#allocation11], %s910
        // Predicated region
        $region73: #{tpu_custom_call.1} parent=51 // pred_check
          %p912 = pneg %p255
        $region74: #{tpu_custom_call.1} parent=51 // pred_check_branch
          %914 = sbr.rel (%p912) target = $region76
        $region75: #{tpu_custom_call.1} parent=51 // pred_region
          %s915 = smul.u32 2, %s34
          %s917 = ssub.s32 256, 256
          %918 = vsyncadd %s908, %s917
          %s919 = smul.addr %s33, 2
          %s920 = sadd.s32 %s915, %s919
          %s921 = smul.addr %s920, 128
          %s922 = scalar_lea.hbm %s8, %s921
          %s923 = sshll.u32 %s911, 4
          %s924 = int_to_ptr.vmem [resolvable:$true] %s923
          %929 = dma.vmem_to_hbm [thread:$0]  %s924, 256, %s922, %s908, 128, 128, 8
        $region76: #{tpu_custom_call.1} parent=51 // pred_fallthru
          _
      $region52: #{tpu_custom_call.1} parent=5 // pred_fallthru
        _
      %p930 = scmp.le.s32.totalorder 2, %s24
      // Predicated region
      $region77: #{tpu_custom_call.1} parent=5 // pred_check
        %p931 = pneg %p930
      $region78: #{tpu_custom_call.1} parent=5 // pred_check_branch
        %933 = sbr.rel (%p931) target = $region80
      $region79: #{tpu_custom_call.1} parent=5 // pred_region
        %s934 = ssub.s32 %s24, 2
        // Predicated region
        $region81: #{tpu_custom_call.1} parent=79 // pred_check
          %p935 = pneg %p261
        $region82: #{tpu_custom_call.1} parent=79 // pred_check_branch
          %937 = sbr.rel (%p935) target = $region84
        $region83: #{tpu_custom_call.1} parent=79 // pred_region
          %s938 = sand.u32 %s246, 1
          %s939 = scalar_lea.sflag [#allocation4], %s938
          %s940 = sand.u32 %s246, 1
          %s941 = smul.addr %s940, 16
          %s942 = scalar_lea.vmem [#allocation11], %s941
          %943 = dma.done %s939, 256
        $region84: #{tpu_custom_call.1} parent=79 // pred_fallthru
          _
      $region80: #{tpu_custom_call.1} parent=5 // pred_fallthru
        _
    $region6: #{tpu_custom_call.1} parent=1 // loop_footer
      %s28 = sadd.s32 1, %s24
    $region7: #{tpu_custom_call.1} parent=1 // loop_footer_branch
      %23 = sbr.rel target = $region3
    $region8: #{tpu_custom_call.1} parent=1 // loop_exit
      _
    %944 = vsyncpa [#allocation3], 1
    %s945 = scalar_lea.sflag [#allocation3], 1
    %946 = vsyncpa %s945, 1
    %947 = vsyncpa [#allocation6], 1
    %s948 = scalar_lea.sflag [#allocation6], 1
    %949 = vsyncpa %s948, 1
    %950 = vsyncpa [#allocation9], 1
    %951 = vsyncpa [#allocation4], 1
    %s952 = scalar_lea.sflag [#allocation4], 1
    %953 = vsyncpa %s952, 1

</llo_original>
